<compile_context>
chip_gen: v5e
topology: v5e:2x2
jax: 0.10.0
libtpu: 0.0.40
codegen_flags: <defaults>
</compile_context>

<pallas_src>
import jax
import jax.numpy as jnp
from jax.experimental import pallas as pl
from jax.experimental.pallas import tpu as pltpu

LANE = 128
SUBLANE = 8


def _round_up(x, m):
    return (x + m - 1) // m * m


def _make_fused_kernel(n_layers, npad, w_dtype):
    """Kernel over (x_tile, w_slab, c_slab, out_tile).

    x_tile : (TB, npad) f32            activation tile (batch on sublanes, features on lanes)
    w_slab : (n_layers*npad, npad) bf16  per-layer transposed, zero-padded weights
    c_slab : (>=n_layers, npad) f32      per-layer folded bias constants
    """

    def kernel(x_ref, w_ref, c_ref, o_ref):
        x = x_ref[...]                                      # (TB, npad) f32
        for i in range(n_layers):                           # static unroll
            w = w_ref[i * npad:(i + 1) * npad, :]           # (npad, npad) bf16
            c = c_ref[i:i + 1, :]                           # (1, npad) f32
            x = jnp.dot(x.astype(w_dtype), w,
                        preferred_element_type=jnp.float32) + c
        o_ref[...] = x

    return kernel


class FF:
    """Pallas/JAX port of the PyTorch `ff` module (single fused, batched kernel)."""

    def __init__(self, nodes_per_layer, key):
        self.weights = []
        self.biases = []
        for i in range(len(nodes_per_layer)):
            key, kb = jax.random.split(key)
            # torch.rand -> uniform [0, 1)
            self.biases.append(
                jax.random.uniform(kb, (nodes_per_layer[i], 1), dtype=jnp.float32))
            if i <= 0:
                continue
            key, kw = jax.random.split(key)
            self.weights.append(
                jax.random.uniform(
                    kw, (nodes_per_layer[i], nodes_per_layer[i - 1]),
                    dtype=jnp.float32))

        self._n_layers = len(self.weights)
        self._n_in = nodes_per_layer[0]
        self._n_out = nodes_per_layer[-1]
        # Pad every layer width to a full lane multiple -> all matmuls/stores lane-dense.
        self._npad = _round_up(max(nodes_per_layer), LANE)

        # ---- one-time host-side parameter packing --------------------------
        w_blocks, c_rows = [], []
        for i, w in enumerate(self.weights):
            n_out, n_in = w.shape
            wt = jnp.transpose(w)                                   # (n_in, n_out)
            blk = jnp.zeros((self._npad, self._npad), jnp.float32)
            blk = blk.at[:n_in, :n_out].set(wt)
            w_blocks.append(blk)
            # Fold the pre-matmul bias:  (x + b) @ W^T = x @ W^T + (b^T @ W^T)
            c = jnp.dot(jnp.transpose(self.biases[i]), wt,
                        precision=jax.lax.Precision.HIGHEST)        # (1, n_out)
            if i == self._n_layers - 1:
                c = c + jnp.transpose(self.biases[-1])              # absorb final bias
            crow = jnp.zeros((1, self._npad), jnp.float32)
            crow = crow.at[:, :n_out].set(c)
            c_rows.append(crow)

        self._w_slab = jnp.concatenate(w_blocks, axis=0).astype(jnp.bfloat16)
        c_pad = _round_up(max(self._n_layers, 1), SUBLANE)
        c_rows.append(jnp.zeros((c_pad - self._n_layers, self._npad), jnp.float32))
        self._c_slab = jnp.concatenate(c_rows, axis=0)

        # End-to-end jitted entry points (pad -> kernel -> slice, all one dispatch).
        self._forward_single = jax.jit(self._single_impl)
        self.forward_batch = jax.jit(self._batched_impl)

    # -- pallas_call builder --------------------------------------------------
    def _build_call(self, b_pad, tb):
        kernel = _make_fused_kernel(self._n_layers, self._npad, self._w_slab.dtype)
        return pl.pallas_call(
            kernel,
            out_shape=jax.ShapeDtypeStruct((b_pad, self._npad), jnp.float32),
            grid=(b_pad // tb,),
            in_specs=[
                pl.BlockSpec((tb, self._npad), lambda b: (b, 0)),
                pl.BlockSpec(self._w_slab.shape, lambda b: (0, 0)),  # VMEM-resident slab
                pl.BlockSpec(self._c_slab.shape, lambda b: (0, 0)),  # VMEM-resident slab
            ],
            out_specs=pl.BlockSpec((tb, self._npad), lambda b: (b, 0)),
            compiler_params=pltpu.CompilerParams(
                dimension_semantics=("parallel",)),   # megacore sharding on v7x
        )

    def _batched_impl(self, xb):
        """xb: (B, n_in) f32 -> (B, n_out) f32."""
        B = xb.shape[0]
        tb = min(256, _round_up(B, SUBLANE))
        b_pad = _round_up(B, tb)
        x_pad = jnp.zeros((b_pad, self._npad), jnp.float32)
        x_pad = x_pad.at[:B, :self._n_in].set(xb.astype(jnp.float32))
        out = self._build_call(b_pad, tb)(x_pad, self._w_slab, self._c_slab)
        return out[:B, :self._n_out]

    def _single_impl(self, x_col):
        out_row = self._batched_impl(jnp.transpose(x_col))   # (1, n_out)
        return jnp.transpose(out_row)                        # (n_out, 1) torch layout

    # -- public API (same semantics as the torch module) ----------------------
    def forward(self, x):
        if x.shape[1] != 1:
            return None
        if x.shape[0] != self.weights[0].shape[1]:
            return None
        return self._forward_single(x)

    # -- pure-JAX references for correctness -----------------------------------
    def forward_ref(self, x):
        for i, w in enumerate(self.weights):
            x = jnp.dot(w, x + self.biases[i],
                        precision=jax.lax.Precision.HIGHEST)
        return x + self.biases[-1]

    def forward_ref_batch(self, xb):
        for i, w in enumerate(self.weights):
            xb = jnp.dot(xb + jnp.transpose(self.biases[i]), jnp.transpose(w),
                         precision=jax.lax.Precision.HIGHEST)
        return xb + jnp.transpose(self.biases[-1])


if __name__ == "__main__":
    nodes_per_layer = [32, 64, 48, 16]
    key = jax.random.PRNGKey(0)
    key, kx, kb = jax.random.split(key, 3)

    model = FF(nodes_per_layer, key)

    # Single-vector path (torch-module semantics: (n_in, 1) column in/out).
    x = jax.random.uniform(kx, (nodes_per_layer[0], 1), dtype=jnp.float32)
    out = jax.block_until_ready(model.forward(x))
    ref = model.forward_ref(x)
    assert out.shape == (nodes_per_layer[-1], 1)
    # bf16 weights / bf16 activation casts with f32 accumulation -> ~1% rel. error budget.
    assert jnp.allclose(out, ref, rtol=2e-2, atol=1e-2), \
        float(jnp.max(jnp.abs(out - ref)))

    # Batched path: amortizes one kernel launch over many vectors (fills MXU rows).
    xb = jax.random.uniform(kb, (64, nodes_per_layer[0]), dtype=jnp.float32)
    outb = jax.block_until_ready(model.forward_batch(xb))
    refb = model.forward_ref_batch(xb)
    assert outb.shape == (64, nodes_per_layer[-1])
    assert jnp.allclose(outb, refb, rtol=2e-2, atol=1e-2), \
        float(jnp.max(jnp.abs(outb - refb)))

    # TODO(synk): training/autograd (nn.Parameter registration) is not ported; inference only.
    print("KERNEL_OK")
</pallas_src>

<mosaic_0001>
module attributes {stable_mosaic.version = 11 : i64} {
  func.func @kernel(%arg0: i32, %arg1: memref<8x128xf32, #tpu.memory_space<vmem>>, %arg2: memref<384x128xbf16, #tpu.memory_space<vmem>>, %arg3: memref<8x128xf32, #tpu.memory_space<vmem>>, %arg4: memref<8x128xf32, #tpu.memory_space<vmem>>) attributes {dimension_semantics = [#tpu.dimension_semantics<parallel>], iteration_bounds = array<i64: 1>, scalar_prefetch = 0 : i64, scratch_operands = 0 : i64, tpu.core_type = #tpu.core_type<tc>, window_params = [{transform_indices = @transform_0, window_bounds = array<i64: 8, 128>}, {pipeline_mode = #tpu.pipeline_mode<synchronous>, transform_indices = @transform_1, window_bounds = array<i64: 384, 128>}, {pipeline_mode = #tpu.pipeline_mode<synchronous>, transform_indices = @transform_2, window_bounds = array<i64: 8, 128>}, {transform_indices = @transform_3, window_bounds = array<i64: 8, 128>}]} {
    %c0 = arith.constant 0 : index
    %c0_0 = arith.constant 0 : index
    %0 = vector.load %arg1[%c0, %c0_0] : memref<8x128xf32, #tpu.memory_space<vmem>>, vector<8x128xf32>
    %c0_1 = arith.constant 0 : index
    %c0_2 = arith.constant 0 : index
    %1 = vector.load %arg2[%c0_1, %c0_2] : memref<384x128xbf16, #tpu.memory_space<vmem>>, vector<128x128xbf16>
    %c0_3 = arith.constant 0 : index
    %c0_4 = arith.constant 0 : index
    %2 = vector.load %arg3[%c0_3, %c0_4] : memref<8x128xf32, #tpu.memory_space<vmem>>, vector<1x128xf32>
    %3 = arith.truncf %0 : vector<8x128xf32> to vector<8x128xbf16>
    %cst = arith.constant dense<0.000000e+00> : vector<8x128xf32>
    %4 = tpu.matmul %3, %1, %cst {dimension_numbers = #tpu.dot_dimension_numbers<[1], [0], [0], [1], [0, 0, 1, 1], [], []>} : vector<8x128xbf16>, vector<128x128xbf16>, vector<8x128xf32> -> vector<8x128xf32>
    %5 = vector.broadcast %2 : vector<1x128xf32> to vector<8x128xf32>
    %6 = arith.addf %4, %5 : vector<8x128xf32>
    %c128 = arith.constant 128 : index
    %c0_5 = arith.constant 0 : index
    %7 = vector.load %arg2[%c128, %c0_5] : memref<384x128xbf16, #tpu.memory_space<vmem>>, vector<128x128xbf16>
    %c1 = arith.constant 1 : index
    %c0_6 = arith.constant 0 : index
    %8 = vector.load %arg3[%c1, %c0_6] : memref<8x128xf32, #tpu.memory_space<vmem>>, vector<1x128xf32>
    %9 = arith.truncf %6 : vector<8x128xf32> to vector<8x128xbf16>
    %cst_7 = arith.constant dense<0.000000e+00> : vector<8x128xf32>
    %10 = tpu.matmul %9, %7, %cst_7 {dimension_numbers = #tpu.dot_dimension_numbers<[1], [0], [0], [1], [0, 0, 1, 1], [], []>} : vector<8x128xbf16>, vector<128x128xbf16>, vector<8x128xf32> -> vector<8x128xf32>
    %11 = vector.broadcast %8 : vector<1x128xf32> to vector<8x128xf32>
    %12 = arith.addf %10, %11 : vector<8x128xf32>
    %c256 = arith.constant 256 : index
    %c0_8 = arith.constant 0 : index
    %13 = vector.load %arg2[%c256, %c0_8] : memref<384x128xbf16, #tpu.memory_space<vmem>>, vector<128x128xbf16>
    %c2 = arith.constant 2 : index
    %c0_9 = arith.constant 0 : index
    %14 = vector.load %arg3[%c2, %c0_9] : memref<8x128xf32, #tpu.memory_space<vmem>>, vector<1x128xf32>
    %15 = arith.truncf %12 : vector<8x128xf32> to vector<8x128xbf16>
    %cst_10 = arith.constant dense<0.000000e+00> : vector<8x128xf32>
    %16 = tpu.matmul %15, %13, %cst_10 {dimension_numbers = #tpu.dot_dimension_numbers<[1], [0], [0], [1], [0, 0, 1, 1], [], []>} : vector<8x128xbf16>, vector<128x128xbf16>, vector<8x128xf32> -> vector<8x128xf32>
    %17 = vector.broadcast %14 : vector<1x128xf32> to vector<8x128xf32>
    %18 = arith.addf %16, %17 : vector<8x128xf32>
    %c0_11 = arith.constant 0 : index
    %c0_12 = arith.constant 0 : index
    %19 = vector.load %arg4[%c0_11, %c0_12] : memref<8x128xf32, #tpu.memory_space<vmem>>, vector<8x128xf32>
    tpu.vector_store %arg4[%c0_11, %c0_12], %18 {strides = array<i32>} : memref<8x128xf32, #tpu.memory_space<vmem>>, vector<8x128xf32>,
    return
  }
  func.func @transform_0(%arg0: i32) -> (i32, i32) {
    %c0_i32 = arith.constant 0 : i32
    %c0_i32_0 = arith.constant 0 : i32
    return %arg0, %c0_i32 : i32, i32
  }
  func.func @transform_1(%arg0: i32) -> (i32, i32) {
    %c0_i32 = arith.constant 0 : i32
    %c0_i32_0 = arith.constant 0 : i32
    %c0_i32_1 = arith.constant 0 : i32
    return %c0_i32, %c0_i32_0 : i32, i32
  }
  func.func @transform_2(%arg0: i32) -> (i32, i32) {
    %c0_i32 = arith.constant 0 : i32
    %c0_i32_0 = arith.constant 0 : i32
    %c0_i32_1 = arith.constant 0 : i32
    return %c0_i32, %c0_i32_0 : i32, i32
  }
  func.func @transform_3(%arg0: i32) -> (i32, i32) {
    %c0_i32 = arith.constant 0 : i32
    %c0_i32_0 = arith.constant 0 : i32
    return %arg0, %c0_i32 : i32, i32
  }
}

</mosaic_0001>

<llo_original>
// kernel: _single_impl.1
$region0: #{_single_impl.1}
  #allocation0 [shape = 'u32[]', space=smem, size = 0x4, offset = 0x4, fixed_abs, tag = 'smem constant byte address 0x4 - core index']
  #allocation1 [shape = 'u32[72,128]{1,0:T(1,128)}', space=vmem, size = 0x9000, scoped, tag = 'internal scratch']
  %s0 = inlined_call_operand.vmem [shape: f32[8,128], index: 0, kind: input, shape index: {}]
  %s1 = inlined_call_operand.hbm [shape: bf16[384,128], index: 1, kind: input, shape index: {}]
  %s2 = inlined_call_operand.vmem [shape: f32[8,128], index: 2, kind: input, shape index: {}]
  %s3 = inlined_call_operand.vmem [shape: f32[8,128], index: 3, kind: output, shape index: {}]
  %s4 = sld [smem:[#allocation0]]
  $region26: #{_single_impl.1} parent=0
    _
  %s6 = ssub.s32 1, %s4
  %s7 = scalar_select 0, %s6, %s4
  $region1: #{_single_impl.1} parent=0
    #allocation2 [shape = 'u8[98304]{0}', space=vmem, size = 0x18000, scoped, tag = 'input window, operand 1, single buffered']
    #allocation3 [shape = 's32[1]{0}', space=sflag, size = 0x4, scoped, tag = 'scoped memory for _single_impl.1']
    %8 = vsyncpa [#allocation3], 0
    // Predicated region
    $region2: #{_single_impl.1} parent=1 // pred_check
      _
    $region3: #{_single_impl.1} parent=1 // pred_check_branch
      %10 = sbr.rel (0) target = $region5
    $region4: #{_single_impl.1} parent=1 // pred_region
      _
    $region5: #{_single_impl.1} parent=1 // pred_fallthru
      _
    // Predicated region
    $region6: #{_single_impl.1} parent=1 // pred_check
      _
    $region7: #{_single_impl.1} parent=1 // pred_check_branch
      %12 = sbr.rel (0) target = $region9
    $region8: #{_single_impl.1} parent=1 // pred_region
      %14 = vsyncadd [#allocation3], 0
      %s15 = sshll.u32 %s1, 4
      %s16 = int_to_ptr.hbm [resolvable:$true] %s15
      %s17 = sshll.u32 [#allocation2], 4
      %s18 = int_to_ptr.vmem [resolvable:$true] %s17
      %23 = dma.hbm_to_vmem [thread:$0]  %s16, 3072, %s18, [#allocation3], 64, 64, 4
    $region9: #{_single_impl.1} parent=1 // pred_fallthru
      _
    // Predicated region
    $region10: #{_single_impl.1} parent=1 // pred_check
      _
    $region11: #{_single_impl.1} parent=1 // pred_check_branch
      %25 = sbr.rel (0) target = $region13
    $region12: #{_single_impl.1} parent=1 // pred_region
      _
    $region13: #{_single_impl.1} parent=1 // pred_fallthru
      _
    // Predicated region
    $region14: #{_single_impl.1} parent=1 // pred_check
      _
    $region15: #{_single_impl.1} parent=1 // pred_check_branch
      %27 = sbr.rel (0) target = $region17
    $region16: #{_single_impl.1} parent=1 // pred_region
      %29 = dma.done [#allocation3], 3072
    $region17: #{_single_impl.1} parent=1 // pred_fallthru
      _
    %v30 = vld [vmem:[%s0] sm:$0xff]
    %v31 = vld [vmem:[#allocation2] sm:$0xf]
    %v32 = vld [vmem:[#allocation2 + $0x4] sm:$0xf]
    %v33 = vld [vmem:[#allocation2 + $0x8] sm:$0xf]
    %v34 = vld [vmem:[#allocation2 + $0xc] sm:$0xf]
    %v35 = vld [vmem:[#allocation2 + $0x10] sm:$0xf]
    %v36 = vld [vmem:[#allocation2 + $0x14] sm:$0xf]
    %v37 = vld [vmem:[#allocation2 + $0x18] sm:$0xf]
    %v38 = vld [vmem:[#allocation2 + $0x1c] sm:$0xf]
    %v39 = vld [vmem:[#allocation2 + $0x20] sm:$0xf]
    %v40 = vld [vmem:[#allocation2 + $0x24] sm:$0xf]
    %v41 = vld [vmem:[#allocation2 + $0x28] sm:$0xf]
    %v42 = vld [vmem:[#allocation2 + $0x2c] sm:$0xf]
    %v43 = vld [vmem:[#allocation2 + $0x30] sm:$0xf]
    %v44 = vld [vmem:[#allocation2 + $0x34] sm:$0xf]
    %v45 = vld [vmem:[#allocation2 + $0x38] sm:$0xf]
    %v46 = vld [vmem:[#allocation2 + $0x3c] sm:$0xf]
    %v47 = vld [vmem:[%s2] sm:$0x1]
    %v48 = vpack.c.bf16 %v30, %v30
    %v49 = vperm.slane %v47, 0
    %v66 = vunpack.c.l.b16 %v31
    %v67 = vunpack.c.l.b16 %v32
    %v68 = vunpack.c.l.b16 %v33
    %v69 = vunpack.c.l.b16 %v34
    %v70 = vunpack.c.l.b16 %v35
    %v71 = vunpack.c.l.b16 %v36
    %v72 = vunpack.c.l.b16 %v37
    %v73 = vunpack.c.l.b16 %v38
    %v74 = vunpack.c.l.b16 %v39
    %v75 = vunpack.c.l.b16 %v40
    %v76 = vunpack.c.l.b16 %v41
    %v77 = vunpack.c.l.b16 %v42
    %v78 = vunpack.c.l.b16 %v43
    %v79 = vunpack.c.l.b16 %v44
    %v80 = vunpack.c.l.b16 %v45
    %v81 = vunpack.c.l.b16 %v46
    %v82 = vpack.c.b16 %v67, %v66
    %v83 = vpack.c.b16 %v69, %v68
    %v84 = vpack.c.b16 %v71, %v70
    %v85 = vpack.c.b16 %v73, %v72
    %v86 = vpack.c.b16 %v75, %v74
    %v87 = vpack.c.b16 %v77, %v76
    %v88 = vpack.c.b16 %v79, %v78
    %v89 = vpack.c.b16 %v81, %v80
    %98 = vmatpush.bf16.msra.mxu0 %v89
    %99 = vmatpush.bf16.msra.mxu0 %v88
    %100 = vmatpush.bf16.msra.mxu0 %v87
    %101 = vmatpush.bf16.msra.mxu0 %v86
    %102 = vmatpush.bf16.msra.mxu0 %v85
    %103 = vmatpush.bf16.msra.mxu0 %v84
    %104 = vmatpush.bf16.msra.mxu0 %v83
    %105 = vmatpush.bf16.msra.mxu0 %v82
    %106 = vmatmul.bf16.gmra.mxu0 %v48
    %v107 = vpop.f32.mrf.mxu0
    %v108 = vadd.f32 %v49, %v107
    %v109 = vpop.f32.mrf.mxu0
    %110 = vdwg.mxu0
    %v111 = vld [vmem:[#allocation2 + $0x40] sm:$0xf]
    %v112 = vld [vmem:[#allocation2 + $0x44] sm:$0xf]
    %v113 = vld [vmem:[#allocation2 + $0x48] sm:$0xf]
    %v114 = vld [vmem:[#allocation2 + $0x4c] sm:$0xf]
    %v115 = vld [vmem:[#allocation2 + $0x50] sm:$0xf]
    %v116 = vld [vmem:[#allocation2 + $0x54] sm:$0xf]
    %v117 = vld [vmem:[#allocation2 + $0x58] sm:$0xf]
    %v118 = vld [vmem:[#allocation2 + $0x5c] sm:$0xf]
    %v119 = vld [vmem:[#allocation2 + $0x60] sm:$0xf]
    %v120 = vld [vmem:[#allocation2 + $0x64] sm:$0xf]
    %v121 = vld [vmem:[#allocation2 + $0x68] sm:$0xf]
    %v122 = vld [vmem:[#allocation2 + $0x6c] sm:$0xf]
    %v123 = vld [vmem:[#allocation2 + $0x70] sm:$0xf]
    %v124 = vld [vmem:[#allocation2 + $0x74] sm:$0xf]
    %v125 = vld [vmem:[#allocation2 + $0x78] sm:$0xf]
    %v126 = vld [vmem:[#allocation2 + $0x7c] sm:$0xf]
    %v127 = vld [vmem:[%s2 + $0x1] sm:$0x1]
    %v128 = vpack.c.bf16 %v108, %v108
    %v129 = vperm.slane %v127, 0
    %v146 = vunpack.c.l.b16 %v111
    %v147 = vunpack.c.l.b16 %v112
    %v148 = vunpack.c.l.b16 %v113
    %v149 = vunpack.c.l.b16 %v114
    %v150 = vunpack.c.l.b16 %v115
    %v151 = vunpack.c.l.b16 %v116
    %v152 = vunpack.c.l.b16 %v117
    %v153 = vunpack.c.l.b16 %v118
    %v154 = vunpack.c.l.b16 %v119
    %v155 = vunpack.c.l.b16 %v120
    %v156 = vunpack.c.l.b16 %v121
    %v157 = vunpack.c.l.b16 %v122
    %v158 = vunpack.c.l.b16 %v123
    %v159 = vunpack.c.l.b16 %v124
    %v160 = vunpack.c.l.b16 %v125
    %v161 = vunpack.c.l.b16 %v126
    %v162 = vpack.c.b16 %v147, %v146
    %v163 = vpack.c.b16 %v149, %v148
    %v164 = vpack.c.b16 %v151, %v150
    %v165 = vpack.c.b16 %v153, %v152
    %v166 = vpack.c.b16 %v155, %v154
    %v167 = vpack.c.b16 %v157, %v156
    %v168 = vpack.c.b16 %v159, %v158
    %v169 = vpack.c.b16 %v161, %v160
    %178 = vmatpush.bf16.msra.mxu0 %v169
    %179 = vmatpush.bf16.msra.mxu0 %v168
    %180 = vmatpush.bf16.msra.mxu0 %v167
    %181 = vmatpush.bf16.msra.mxu0 %v166
    %182 = vmatpush.bf16.msra.mxu0 %v165
    %183 = vmatpush.bf16.msra.mxu0 %v164
    %184 = vmatpush.bf16.msra.mxu0 %v163
    %185 = vmatpush.bf16.msra.mxu0 %v162
    %186 = vmatmul.bf16.gmra.mxu0 %v128
    %v187 = vpop.f32.mrf.mxu0
    %v188 = vadd.f32 %v129, %v187
    %v189 = vpop.f32.mrf.mxu0
    %190 = vdwg.mxu0
    %v191 = vld [vmem:[#allocation2 + $0x80] sm:$0xf]
    %v192 = vld [vmem:[#allocation2 + $0x84] sm:$0xf]
    %v193 = vld [vmem:[#allocation2 + $0x88] sm:$0xf]
    %v194 = vld [vmem:[#allocation2 + $0x8c] sm:$0xf]
    %v195 = vld [vmem:[#allocation2 + $0x90] sm:$0xf]
    %v196 = vld [vmem:[#allocation2 + $0x94] sm:$0xf]
    %v197 = vld [vmem:[#allocation2 + $0x98] sm:$0xf]
    %v198 = vld [vmem:[#allocation2 + $0x9c] sm:$0xf]
    %v199 = vld [vmem:[#allocation2 + $0xa0] sm:$0xf]
    %v200 = vld [vmem:[#allocation2 + $0xa4] sm:$0xf]
    %v201 = vld [vmem:[#allocation2 + $0xa8] sm:$0xf]
    %v202 = vld [vmem:[#allocation2 + $0xac] sm:$0xf]
    %v203 = vld [vmem:[#allocation2 + $0xb0] sm:$0xf]
    %v204 = vld [vmem:[#allocation2 + $0xb4] sm:$0xf]
    %v205 = vld [vmem:[#allocation2 + $0xb8] sm:$0xf]
    %v206 = vld [vmem:[#allocation2 + $0xbc] sm:$0xf]
    %v207 = vld [vmem:[%s2 + $0x2] sm:$0x1]
    %v208 = vpack.c.bf16 %v188, %v188
    %v209 = vperm.slane %v207, 0
    %v226 = vunpack.c.l.b16 %v191
    %v227 = vunpack.c.l.b16 %v192
    %v228 = vunpack.c.l.b16 %v193
    %v229 = vunpack.c.l.b16 %v194
    %v230 = vunpack.c.l.b16 %v195
    %v231 = vunpack.c.l.b16 %v196
    %v232 = vunpack.c.l.b16 %v197
    %v233 = vunpack.c.l.b16 %v198
    %v234 = vunpack.c.l.b16 %v199
    %v235 = vunpack.c.l.b16 %v200
    %v236 = vunpack.c.l.b16 %v201
    %v237 = vunpack.c.l.b16 %v202
    %v238 = vunpack.c.l.b16 %v203
    %v239 = vunpack.c.l.b16 %v204
    %v240 = vunpack.c.l.b16 %v205
    %v241 = vunpack.c.l.b16 %v206
    %v242 = vpack.c.b16 %v227, %v226
    %v243 = vpack.c.b16 %v229, %v228
    %v244 = vpack.c.b16 %v231, %v230
    %v245 = vpack.c.b16 %v233, %v232
    %v246 = vpack.c.b16 %v235, %v234
    %v247 = vpack.c.b16 %v237, %v236
    %v248 = vpack.c.b16 %v239, %v238
    %v249 = vpack.c.b16 %v241, %v240
    %258 = vmatpush.bf16.msra.mxu0 %v249
    %259 = vmatpush.bf16.msra.mxu0 %v248
    %260 = vmatpush.bf16.msra.mxu0 %v247
    %261 = vmatpush.bf16.msra.mxu0 %v246
    %262 = vmatpush.bf16.msra.mxu0 %v245
    %263 = vmatpush.bf16.msra.mxu0 %v244
    %264 = vmatpush.bf16.msra.mxu0 %v243
    %265 = vmatpush.bf16.msra.mxu0 %v242
    %266 = vmatmul.bf16.gmra.mxu0 %v208
    %v267 = vpop.f32.mrf.mxu0
    %v268 = vadd.f32 %v209, %v267
    %v269 = vpop.f32.mrf.mxu0
    %270 = vdwg.mxu0
    %271 = vst [vmem:[%s3] sm:$0xff] %v268
    // Predicated region
    $region18: #{_single_impl.1} parent=1 // pred_check
      _
    $region19: #{_single_impl.1} parent=1 // pred_check_branch
      %273 = sbr.rel (0) target = $region21
    $region20: #{_single_impl.1} parent=1 // pred_region
      _
    $region21: #{_single_impl.1} parent=1 // pred_fallthru
      _
    // Predicated region
    $region22: #{_single_impl.1} parent=1 // pred_check
      _
    $region23: #{_single_impl.1} parent=1 // pred_check_branch
      %275 = sbr.rel (0) target = $region25
    $region24: #{_single_impl.1} parent=1 // pred_region
      _
    $region25: #{_single_impl.1} parent=1 // pred_fallthru
      _
    %276 = vsyncpa [#allocation3], 1

</llo_original>
